<compile_context>
chip_gen: v7x
topology: tpu7x:2x2x1
jax: 0.10.0
libtpu: 0.0.40
codegen_flags: <defaults>
</compile_context>

<pallas_src>
import functools
import math

import jax
import jax.numpy as jnp
from jax.experimental import pallas as pl
from jax.experimental.pallas import tpu as pltpu


_VMEM_LIMIT_BYTES = 64 * 1024 * 1024


def _compiler_params(n_grid_axes=1):
    return pltpu.CompilerParams(
        dimension_semantics=("parallel",) * n_grid_axes,
        vmem_limit_bytes=_VMEM_LIMIT_BYTES,
    )


def _row_tile(m, cap=256):
    """Largest MXU-friendly row tile <= cap that exactly divides m (or m itself if small).

    If m > cap and nothing divides it, fall back to a 256-row tile with a cdiv grid
    (Pallas handles the partial remainder block) instead of one whole-array block.
    """
    if m <= cap:
        return m
    for t in (256, 128, 64, 32, 16, 8):
        if t <= cap and m % t == 0:
            return t
    return min(cap, 256)


# ----------------------------------------------------------------------------
# Pallas kernels
# ----------------------------------------------------------------------------

def _dense_kernel(x_ref, w_ref, b_ref, o_ref, *, activation):
    # bf16 operands, f32 accumulation on the MXU, f32 epilogue math.
    y = jnp.dot(x_ref[...], w_ref[...], preferred_element_type=jnp.float32) + b_ref[...]
    if activation == "gelu":
        c = math.sqrt(2.0 / math.pi)
        y = 0.5 * y * (1.0 + jnp.tanh(c * (y + 0.044715 * y * y * y)))
    elif activation == "tanh":
        y = jnp.tanh(y)
    o_ref[...] = y.astype(o_ref.dtype)


def dense(x, w, b, activation="none", out_dtype=jnp.bfloat16):
    """(M, K) @ (K, N) + b with optional activation; rows tiled over a parallel grid."""
    M, K = x.shape
    _, N = w.shape
    tm = _row_tile(M)
    return pl.pallas_call(
        functools.partial(_dense_kernel, activation=activation),
        out_shape=jax.ShapeDtypeStruct((M, N), out_dtype),
        grid=(pl.cdiv(M, tm),),
        in_specs=[
            pl.BlockSpec((tm, K), lambda i: (i, 0)),
            pl.BlockSpec((K, N), lambda i: (0, 0)),
            pl.BlockSpec((1, N), lambda i: (0, 0)),
        ],
        out_specs=pl.BlockSpec((tm, N), lambda i: (i, 0)),
        compiler_params=_compiler_params(1),
    )(x, w, b.reshape(1, N))


def _ln_kernel(x_ref, g_ref, b_ref, o_ref, *, eps):
    x = x_ref[...].astype(jnp.float32)
    mu = jnp.mean(x, axis=-1, keepdims=True)
    var = jnp.mean((x - mu) * (x - mu), axis=-1, keepdims=True)
    y = (x - mu) * jax.lax.rsqrt(var + eps)
    o_ref[...] = (y * g_ref[...] + b_ref[...]).astype(o_ref.dtype)


def layernorm(x, gamma, beta, eps=1e-12, out_dtype=jnp.bfloat16):
    """LayerNorm over the last axis (embedding LayerNorm)."""
    M, H = x.shape
    tm = _row_tile(M)
    return pl.pallas_call(
        functools.partial(_ln_kernel, eps=eps),
        out_shape=jax.ShapeDtypeStruct((M, H), out_dtype),
        grid=(pl.cdiv(M, tm),),
        in_specs=[
            pl.BlockSpec((tm, H), lambda i: (i, 0)),
            pl.BlockSpec((1, H), lambda i: (0, 0)),
            pl.BlockSpec((1, H), lambda i: (0, 0)),
        ],
        out_specs=pl.BlockSpec((tm, H), lambda i: (i, 0)),
        compiler_params=_compiler_params(1),
    )(x, gamma.reshape(1, H), beta.reshape(1, H))


def _attn_block_kernel(x_ref, wqkv_ref, bqkv_ref, wo_ref, bo_ref, g_ref, bt_ref, o_ref,
                       *, n_heads, dh, hidden, scale, eps):
    """Fused per-batch-element attention block:
       qkv = x @ w_qkv + b  (stays in VMEM)
       ctx = concat_h softmax(q_h k_h^T / sqrt(dh)) v_h
       out = LayerNorm(x + ctx @ wo + bo)
    """
    x = x_ref[0]                                                   # (S, H) bf16
    qkv = (jnp.dot(x, wqkv_ref[...], preferred_element_type=jnp.float32)
           + bqkv_ref[...]).astype(jnp.bfloat16)                   # (S, 3H) bf16, VMEM-resident

    # TODO(synk): heads are sliced 64 lanes at a time; batching aligned head pairs (128 lanes)
    # or permuting w_qkv columns offline would further cut lane-relayout traffic.
    outs = []
    for h in range(n_heads):
        q = qkv[:, h * dh:(h + 1) * dh]
        k = qkv[:, hidden + h * dh: hidden + (h + 1) * dh]
        v = qkv[:, 2 * hidden + h * dh: 2 * hidden + (h + 1) * dh]
        # Contract last dims of q and k directly -> no explicit (S, dh) transpose.
        s = jax.lax.dot_general(q, k, (((1,), (1,)), ((), ())),
                                preferred_element_type=jnp.float32) * scale
        m = jnp.max(s, axis=-1, keepdims=True)
        p = jnp.exp(s - m)
        p = p * pl.reciprocal(jnp.sum(p, axis=-1, keepdims=True), approx=True)
        o_h = jnp.dot(p.astype(jnp.bfloat16), v, preferred_element_type=jnp.float32)
        outs.append(o_h.astype(jnp.bfloat16))                      # halve live head bytes
    ctx = jnp.concatenate(outs, axis=-1)                           # (S, H) bf16, lane-dense

    # Output projection + residual + LayerNorm, all in f32 while the tile is in VMEM.
    y = jnp.dot(ctx, wo_ref[...], preferred_element_type=jnp.float32) + bo_ref[...]
    y = y + x.astype(jnp.float32)
    mu = jnp.mean(y, axis=-1, keepdims=True)
    var = jnp.mean((y - mu) * (y - mu), axis=-1, keepdims=True)
    y = (y - mu) * jax.lax.rsqrt(var + eps)
    o_ref[0] = (y * g_ref[...] + bt_ref[...]).astype(o_ref.dtype)


def attention_block(x, w_qkv, b_qkv, wo, bo, gamma, beta, n_heads,
                    eps=1e-12, out_dtype=jnp.bfloat16):
    """Fused QKV projection + multi-head attention + output projection + residual + LN."""
    B, S, H = x.shape
    H3 = 3 * H
    dh = H // n_heads
    scale = 1.0 / math.sqrt(dh)
    return pl.pallas_call(
        functools.partial(_attn_block_kernel, n_heads=n_heads, dh=dh, hidden=H,
                          scale=scale, eps=eps),
        out_shape=jax.ShapeDtypeStruct((B, S, H), out_dtype),
        grid=(B,),
        in_specs=[
            pl.BlockSpec((1, S, H), lambda b: (b, 0, 0)),
            pl.BlockSpec((H, H3), lambda b: (0, 0)),
            pl.BlockSpec((1, H3), lambda b: (0, 0)),
            pl.BlockSpec((H, H), lambda b: (0, 0)),
            pl.BlockSpec((1, H), lambda b: (0, 0)),
            pl.BlockSpec((1, H), lambda b: (0, 0)),
            pl.BlockSpec((1, H), lambda b: (0, 0)),
        ],
        out_specs=pl.BlockSpec((1, S, H), lambda b: (b, 0, 0)),
        compiler_params=_compiler_params(1),
    )(x, w_qkv, b_qkv.reshape(1, H3), wo, bo.reshape(1, H),
      gamma.reshape(1, H), beta.reshape(1, H))


def _ffn_kernel(x_ref, wi_ref, bi_ref, wf_ref, bf_ref, g_ref, bt_ref, o_ref,
                *, eps, n_chunks):
    """Fused FFN block per row tile:
       LayerNorm(x + GELU(x @ wi + bi) @ wf + bf)
       The intermediate (tm, N_i) activation never leaves VMEM; it is produced/consumed in
       128-lane-aligned column chunks so GELU epilogue overlaps MXU work of the next chunk.
    """
    x = x_ref[...]                                                 # (tm, H) bf16
    n_i = wi_ref.shape[1]
    ck = n_i // n_chunks
    c_gelu = math.sqrt(2.0 / math.pi)

    y = jnp.zeros((x_ref.shape[0], wf_ref.shape[1]), jnp.float32)
    for c in range(n_chunks):
        lo, hi = c * ck, (c + 1) * ck
        h = (jnp.dot(x, wi_ref[:, lo:hi], preferred_element_type=jnp.float32)
             + bi_ref[:, lo:hi])
        # tanh-approximate GELU (HF "gelu_new"); exact-erf gelu differs only slightly.
        h = 0.5 * h * (1.0 + jnp.tanh(c_gelu * (h + 0.044715 * h * h * h)))
        y = y + jnp.dot(h.astype(wf_ref.dtype), wf_ref[lo:hi, :],
                        preferred_element_type=jnp.float32)

    y = y + bf_ref[...] + x.astype(jnp.float32)                    # bias + residual
    mu = jnp.mean(y, axis=-1, keepdims=True)
    var = jnp.mean((y - mu) * (y - mu), axis=-1, keepdims=True)
    y = (y - mu) * jax.lax.rsqrt(var + eps)
    o_ref[...] = (y * g_ref[...] + bt_ref[...]).astype(o_ref.dtype)


def ffn_block(x, wi, bi, wf, bf, gamma, beta, eps=1e-12, out_dtype=jnp.bfloat16):
    """Fused FFN: LayerNorm(x + GELU(x@wi+bi)@wf + bf), one kernel per row tile."""
    M, H = x.shape
    n_i = wi.shape[1]
    tm = _row_tile(M)
    # 4 column chunks when the intermediate dim allows 128-lane-aligned chunks, else 1.
    n_chunks = 4 if (n_i % 512 == 0) else 1
    return pl.pallas_call(
        functools.partial(_ffn_kernel, eps=eps, n_chunks=n_chunks),
        out_shape=jax.ShapeDtypeStruct((M, H), out_dtype),
        grid=(pl.cdiv(M, tm),),
        in_specs=[
            pl.BlockSpec((tm, H), lambda i: (i, 0)),
            pl.BlockSpec((H, n_i), lambda i: (0, 0)),
            pl.BlockSpec((1, n_i), lambda i: (0, 0)),
            pl.BlockSpec((n_i, H), lambda i: (0, 0)),
            pl.BlockSpec((1, H), lambda i: (0, 0)),
            pl.BlockSpec((1, H), lambda i: (0, 0)),
            pl.BlockSpec((1, H), lambda i: (0, 0)),
        ],
        out_specs=pl.BlockSpec((tm, H), lambda i: (i, 0)),
        compiler_params=_compiler_params(1),
    )(x, wi, bi.reshape(1, n_i), wf, bf.reshape(1, H),
      gamma.reshape(1, H), beta.reshape(1, H))


def _pool_kernel(h_ref, m_ref, merged_ref, noise_ref):
    h = h_ref[0].astype(jnp.float32)                     # (S, H)
    m = m_ref[0]                                         # (1, S) lane-dense padding mask (1 = pad)
    total = jnp.sum(h, axis=0, keepdims=True)            # (1, H) column sums
    merged = jnp.dot(m, h, preferred_element_type=jnp.float32)   # (1, H)
    inv = 1.0 / jnp.sum(m)                               # exact; inf when there is no padding,
    merged_ref[0] = merged * inv                         # mirroring the original's divide-by-zero.
    noise_ref[0] = (total - merged) * inv                # noise = colsum - merged (no 2nd matmul)


def masked_pool(hidden, word_mask):
    """BERTBase masked pooling: sum(h*mask)/sum(mask) and sum(h*(1-mask))/sum(mask)."""
    B, S, H = hidden.shape
    m = word_mask.reshape(B, 1, S).astype(jnp.float32)   # lane-dense mask
    spec_h = pl.BlockSpec((1, S, H), lambda b: (b, 0, 0))
    spec_m = pl.BlockSpec((1, 1, S), lambda b: (b, 0, 0))
    spec_o = pl.BlockSpec((1, 1, H), lambda b: (b, 0, 0))
    merged, noise = pl.pallas_call(
        _pool_kernel,
        out_shape=(
            jax.ShapeDtypeStruct((B, 1, H), jnp.float32),
            jax.ShapeDtypeStruct((B, 1, H), jnp.float32),
        ),
        grid=(B,),
        in_specs=[spec_h, spec_m],
        out_specs=(spec_o, spec_o),
        compiler_params=_compiler_params(1),
    )(hidden, m)
    return merged.reshape(B, H), noise.reshape(B, H)


# ----------------------------------------------------------------------------
# Synthetic BERT encoder (deterministic weights) built on the kernels above
# ----------------------------------------------------------------------------

def init_bert_params(key, vocab, hidden, n_layers, n_heads, intermediate,
                     max_pos, type_vocab):
    def nrm(k, shape, dtype=jnp.bfloat16):
        return (0.02 * jax.random.normal(k, shape)).astype(dtype)

    keys = jax.random.split(key, 4 + n_layers)
    params = {
        "word_emb": nrm(keys[0], (vocab, hidden), jnp.float32),
        "pos_emb": nrm(keys[1], (max_pos, hidden), jnp.float32),
        "type_emb": nrm(keys[2], (type_vocab, hidden), jnp.float32),
        "emb_ln_g": jnp.ones((hidden,), jnp.float32),
        "emb_ln_b": jnp.zeros((hidden,), jnp.float32),
        "pool_w": nrm(keys[3], (hidden, hidden)),
        "pool_b": jnp.zeros((hidden,), jnp.float32),
        "layers": [],
    }
    for li in range(n_layers):
        lk = jax.random.split(keys[4 + li], 4)
        params["layers"].append({
            # Fused Q/K/V projection weight: (H, 3H).
            "w_qkv": nrm(lk[0], (hidden, 3 * hidden)),
            "b_qkv": jnp.zeros((3 * hidden,), jnp.float32),
            "wo": nrm(lk[1], (hidden, hidden)), "bo": jnp.zeros((hidden,), jnp.float32),
            "ln1_g": jnp.ones((hidden,), jnp.float32), "ln1_b": jnp.zeros((hidden,), jnp.float32),
            "wi": nrm(lk[2], (hidden, intermediate)), "bi": jnp.zeros((intermediate,), jnp.float32),
            "wf": nrm(lk[3], (intermediate, hidden)), "bf": jnp.zeros((hidden,), jnp.float32),
            "ln2_g": jnp.ones((hidden,), jnp.float32), "ln2_b": jnp.zeros((hidden,), jnp.float32),
        })
    return params


def bert_encoder(params, input_ids, token_type_ids, n_heads):
    B, S = input_ids.shape
    H = params["word_emb"].shape[1]

    # Embeddings (gathers are XLA glue; LayerNorm runs in a Pallas kernel).
    emb = (jnp.take(params["word_emb"], input_ids, axis=0)
           + params["pos_emb"][None, :S, :]
           + jnp.take(params["type_emb"], token_type_ids, axis=0))
    x = layernorm(emb.reshape(B * S, H), params["emb_ln_g"], params["emb_ln_b"])  # (B*S, H) bf16

    for p in params["layers"]:
        # One fused kernel: QKV proj + multi-head attention + out-proj + residual + LN.
        attn = attention_block(x.reshape(B, S, H), p["w_qkv"], p["b_qkv"],
                               p["wo"], p["bo"], p["ln1_g"], p["ln1_b"], n_heads)
        # One fused kernel: FFN-in + GELU + FFN-out + residual + LN (intermediate stays in VMEM).
        x = ffn_block(attn.reshape(B * S, H), p["wi"], p["bi"], p["wf"], p["bf"],
                      p["ln2_g"], p["ln2_b"])

    hidden = x.reshape(B, S, H)
    pooled = dense(hidden[:, 0, :], params["pool_w"], params["pool_b"],
                   activation="tanh", out_dtype=jnp.float32)
    return hidden, pooled


def bert_base_forward(params, inputs, n_heads):
    """Mirror of BERTBase.forward."""
    tok, asp, head, deprel, a_mask, l, bert_sequence, bert_segments_ids = inputs
    S = bert_segments_ids.shape[1]
    bert_sequence = bert_sequence[:, 0:S]

    bert_out, bert_pool_output = bert_encoder(params, bert_sequence, bert_segments_ids, n_heads)

    # sequence_mask(l): True (1.0) at padding positions (idx >= length).
    # The original uses max_len = l.max(); broadcasting against bert_out requires
    # l.max() == S, which the example inputs honor.
    word_mask = (jnp.arange(S, dtype=l.dtype)[None, :] >= l[:, None]).astype(jnp.float32)

    merged_outputs, noise_out = masked_pool(bert_out, word_mask)
    return merged_outputs, bert_pool_output, noise_out


# ----------------------------------------------------------------------------
# Example run
# ----------------------------------------------------------------------------

if __name__ == "__main__":
    # Small synthetic config consistent with the module's forward.
    B, S_full, S = 2, 12, 8
    VOCAB, HIDDEN, LAYERS, HEADS, INTER, MAX_POS, TYPE_VOCAB = 64, 32, 2, 4, 64, 16, 2

    root = jax.random.PRNGKey(0)
    k_param, k_seq, k_seg, k_tok = jax.random.split(root, 4)

    params = init_bert_params(k_param, VOCAB, HIDDEN, LAYERS, HEADS, INTER, MAX_POS, TYPE_VOCAB)

    bert_sequence = jax.random.randint(k_seq, (B, S_full), 0, VOCAB, dtype=jnp.int32)
    bert_segments_ids = jax.random.randint(k_seg, (B, S), 0, TYPE_VOCAB, dtype=jnp.int32)
    # l.max() must equal S (implicit requirement of the original broadcasting).
    l = jnp.array([5, 8], dtype=jnp.int32)

    # Unused-by-forward auxiliary inputs (tok, asp, head, deprel, a_mask).
    tok = jax.random.randint(k_tok, (B, S), 0, VOCAB, dtype=jnp.int32)
    asp = jnp.zeros((B, S), jnp.int32)
    head = jnp.zeros((B, S), jnp.int32)
    deprel = jnp.zeros((B, S), jnp.int32)
    a_mask = jnp.ones((B, S), jnp.float32)

    inputs = (tok, asp, head, deprel, a_mask, l, bert_sequence, bert_segments_ids)

    merged_outputs, bert_pool_output, noise_out = bert_base_forward(params, inputs, HEADS)
    jax.block_until_ready((merged_outputs, bert_pool_output, noise_out))

    assert merged_outputs.shape == (B, HIDDEN)
    assert bert_pool_output.shape == (B, HIDDEN)
    assert noise_out.shape == (B, HIDDEN)
    # TODO(synk): the original divides by the padding-token count (word_mask.sum); a batch
    # entry with l == S reproduces the original's divide-by-zero (inf/nan) exactly.
    print("KERNEL_OK")
</pallas_src>

<mosaic_0001>
module attributes {stable_mosaic.version = 11 : i64} {
  func.func @_ln_kernel(%arg0: i32, %arg1: memref<16x32xf32, #tpu.memory_space<vmem>>, %arg2: memref<1x32xf32, #tpu.memory_space<vmem>>, %arg3: memref<1x32xf32, #tpu.memory_space<vmem>>, %arg4: memref<16x32xbf16, #tpu.memory_space<vmem>>) attributes {dimension_semantics = [#tpu.dimension_semantics<parallel>], iteration_bounds = array<i64: 1>, scalar_prefetch = 0 : i64, scratch_operands = 0 : i64, tpu.core_type = #tpu.core_type<tc>, window_params = [{transform_indices = @transform_0, window_bounds = array<i64: 16, 32>}, {pipeline_mode = #tpu.pipeline_mode<synchronous>, transform_indices = @transform_1, window_bounds = array<i64: 1, 32>}, {pipeline_mode = #tpu.pipeline_mode<synchronous>, transform_indices = @transform_2, window_bounds = array<i64: 1, 32>}, {transform_indices = @transform_3, window_bounds = array<i64: 16, 32>}]} {
    %c0 = arith.constant 0 : index
    %c0_0 = arith.constant 0 : index
    %0 = vector.load %arg1[%c0, %c0_0] : memref<16x32xf32, #tpu.memory_space<vmem>>, vector<16x32xf32>
    %cst = arith.constant dense<0.000000e+00> : vector<16xf32>
    %1 = vector.multi_reduction <add>, %0, %cst [1] : vector<16x32xf32> to vector<16xf32>
    %2 = vector.shape_cast %1 : vector<16xf32> to vector<16x1xf32>
    %cst_1 = arith.constant 3.200000e+01 : f32
    %3 = vector.broadcast %cst_1 : f32 to vector<16x1xf32>
    %4 = arith.divf %2, %3 : vector<16x1xf32>
    %5 = vector.broadcast %4 : vector<16x1xf32> to vector<16x32xf32>
    %6 = arith.subf %0, %5 : vector<16x32xf32>
    %7 = vector.broadcast %4 : vector<16x1xf32> to vector<16x32xf32>
    %8 = arith.subf %0, %7 : vector<16x32xf32>
    %9 = arith.mulf %6, %8 : vector<16x32xf32>
    %cst_2 = arith.constant dense<0.000000e+00> : vector<16xf32>
    %10 = vector.multi_reduction <add>, %9, %cst_2 [1] : vector<16x32xf32> to vector<16xf32>
    %11 = vector.shape_cast %10 : vector<16xf32> to vector<16x1xf32>
    %cst_3 = arith.constant 3.200000e+01 : f32
    %12 = vector.broadcast %cst_3 : f32 to vector<16x1xf32>
    %13 = arith.divf %11, %12 : vector<16x1xf32>
    %14 = vector.broadcast %4 : vector<16x1xf32> to vector<16x32xf32>
    %15 = arith.subf %0, %14 : vector<16x32xf32>
    %cst_4 = arith.constant 9.99999996E-13 : f32
    %16 = vector.broadcast %cst_4 : f32 to vector<16x1xf32>
    %17 = arith.addf %13, %16 : vector<16x1xf32>
    %18 = math.rsqrt %17 : vector<16x1xf32>
    %19 = vector.broadcast %18 : vector<16x1xf32> to vector<16x32xf32>
    %20 = arith.mulf %15, %19 : vector<16x32xf32>
    %c0_5 = arith.constant 0 : index
    %c0_6 = arith.constant 0 : index
    %21 = vector.load %arg2[%c0_5, %c0_6] : memref<1x32xf32, #tpu.memory_space<vmem>>, vector<1x32xf32>
    %22 = vector.broadcast %21 : vector<1x32xf32> to vector<16x32xf32>
    %23 = arith.mulf %20, %22 : vector<16x32xf32>
    %c0_7 = arith.constant 0 : index
    %c0_8 = arith.constant 0 : index
    %24 = vector.load %arg3[%c0_7, %c0_8] : memref<1x32xf32, #tpu.memory_space<vmem>>, vector<1x32xf32>
    %25 = vector.broadcast %24 : vector<1x32xf32> to vector<16x32xf32>
    %26 = arith.addf %23, %25 : vector<16x32xf32>
    %27 = arith.truncf %26 : vector<16x32xf32> to vector<16x32xbf16>
    %c0_9 = arith.constant 0 : index
    %c0_10 = arith.constant 0 : index
    %28 = vector.load %arg4[%c0_9, %c0_10] : memref<16x32xbf16, #tpu.memory_space<vmem>>, vector<16x32xbf16>
    tpu.vector_store %arg4[%c0_9, %c0_10], %27 {strides = array<i32>} : memref<16x32xbf16, #tpu.memory_space<vmem>>, vector<16x32xbf16>,
    return
  }
  func.func @transform_0(%arg0: i32) -> (i32, i32) {
    %c0_i32 = arith.constant 0 : i32
    %c0_i32_0 = arith.constant 0 : i32
    return %arg0, %c0_i32 : i32, i32
  }
  func.func @transform_1(%arg0: i32) -> (i32, i32) {
    %c0_i32 = arith.constant 0 : i32
    %c0_i32_0 = arith.constant 0 : i32
    %c0_i32_1 = arith.constant 0 : i32
    return %c0_i32, %c0_i32_0 : i32, i32
  }
  func.func @transform_2(%arg0: i32) -> (i32, i32) {
    %c0_i32 = arith.constant 0 : i32
    %c0_i32_0 = arith.constant 0 : i32
    %c0_i32_1 = arith.constant 0 : i32
    return %c0_i32, %c0_i32_0 : i32, i32
  }
  func.func @transform_3(%arg0: i32) -> (i32, i32) {
    %c0_i32 = arith.constant 0 : i32
    %c0_i32_0 = arith.constant 0 : i32
    return %arg0, %c0_i32 : i32, i32
  }
}

</mosaic_0001>

<llo_original>
// kernel: tpu_custom_call.1
$region0: #{tpu_custom_call.1}
  #allocation0 [shape = 'u32[]', space=smem, size = 0x4, offset = 0x4, fixed_abs, tag = 'smem constant byte address 0x4 - core index']
  #allocation1 [shape = 'u32[144,128]{1,0:T(1,128)}', space=vmem, size = 0x12000, scoped, tag = 'internal scratch']
  %s0 = inlined_call_operand.hbm [shape: f32[16,32], index: 0, kind: input, shape index: {}]
  %s1 = inlined_call_operand.hbm [shape: f32[1,32], index: 1, kind: input, shape index: {}]
  %s2 = inlined_call_operand.hbm [shape: f32[1,32], index: 2, kind: input, shape index: {}]
  %s3 = inlined_call_operand.hbm [shape: bf16[16,32], index: 3, kind: output, shape index: {}]
  %s4 = sld [smem:[#allocation0]]
  $region34: #{tpu_custom_call.1} parent=0
    _
  %s6 = ssub.s32 1, %s4
  %s7 = scalar_select 0, %s6, %s4
  $region1: #{tpu_custom_call.1} parent=0
    #allocation2 [shape = 'u8[8192]{0}', space=vmem, size = 0x2000, scoped, tag = 'input window, operand 0, single buffered']
    #allocation3 [shape = 's32[1]{0}', space=sflag, size = 0x4, scoped, tag = 'scoped memory for tpu_custom_call.1']
    #allocation4 [shape = 's32[1]{0}', space=sflag, size = 0x4, scoped, tag = 'scoped memory for tpu_custom_call.1']
    #allocation5 [shape = 'u8[512]{0}', space=vmem, size = 0x400, scoped, tag = 'input window, operand 1, single buffered']
    #allocation6 [shape = 's32[1]{0}', space=sflag, size = 0x4, scoped, tag = 'scoped memory for tpu_custom_call.1']
    #allocation7 [shape = 'u8[512]{0}', space=vmem, size = 0x400, scoped, tag = 'input window, operand 2, single buffered']
    #allocation8 [shape = 'u8[4096]{0}', space=vmem, size = 0x1000, scoped, tag = 'output window, operand 0, single buffered']
    %8 = vsyncpa [#allocation3], 0
    %9 = vsyncpa [#allocation6], 0
    %10 = vsyncpa [#allocation4], 0
    // Predicated region
    $region2: #{tpu_custom_call.1} parent=1 // pred_check
      _
    $region3: #{tpu_custom_call.1} parent=1 // pred_check_branch
      %12 = sbr.rel (0) target = $region5
    $region4: #{tpu_custom_call.1} parent=1 // pred_region
      %s14 = ssub.s32 256, 256
      %15 = vsyncadd [#allocation3], %s14
      %s16 = sshll.u32 [#allocation2], 4
      %s17 = int_to_ptr.vmem [resolvable:$true] %s16
      %22 = dma.hbm_to_vmem [thread:$0]  %s0, 256, %s17, [#allocation3], 128, 128, 8
    $region5: #{tpu_custom_call.1} parent=1 // pred_fallthru
      _
    // Predicated region
    $region6: #{tpu_custom_call.1} parent=1 // pred_check
      _
    $region7: #{tpu_custom_call.1} parent=1 // pred_check_branch
      %24 = sbr.rel (0) target = $region9
    $region8: #{tpu_custom_call.1} parent=1 // pred_region
      %s26 = ssub.s32 16, 16
      %27 = vsyncadd [#allocation6], %s26
      %s29 = sshll.u32 [#allocation5], 4
      %s30 = int_to_ptr.vmem [resolvable:$true] %s29
      %32 = dma.hbm_to_vmem [thread:$0]  %s1, 16, %s30, [#allocation6]
    $region9: #{tpu_custom_call.1} parent=1 // pred_fallthru
      _
    // Predicated region
    $region10: #{tpu_custom_call.1} parent=1 // pred_check
      _
    $region11: #{tpu_custom_call.1} parent=1 // pred_check_branch
      %34 = sbr.rel (0) target = $region13
    $region12: #{tpu_custom_call.1} parent=1 // pred_region
      %s36 = ssub.s32 16, 16
      %37 = vsyncadd [#allocation6], %s36
      %s39 = sshll.u32 [#allocation7], 4
      %s40 = int_to_ptr.vmem [resolvable:$true] %s39
      %42 = dma.hbm_to_vmem [thread:$0]  %s2, 16, %s40, [#allocation6]
    $region13: #{tpu_custom_call.1} parent=1 // pred_fallthru
      _
    // Predicated region
    $region14: #{tpu_custom_call.1} parent=1 // pred_check
      _
    $region15: #{tpu_custom_call.1} parent=1 // pred_check_branch
      %44 = sbr.rel (0) target = $region17
    $region16: #{tpu_custom_call.1} parent=1 // pred_region
      %45 = dma.done [#allocation3], 256
    $region17: #{tpu_custom_call.1} parent=1 // pred_fallthru
      _
    // Predicated region
    $region18: #{tpu_custom_call.1} parent=1 // pred_check
      _
    $region19: #{tpu_custom_call.1} parent=1 // pred_check_branch
      %47 = sbr.rel (0) target = $region21
    $region20: #{tpu_custom_call.1} parent=1 // pred_region
      %48 = dma.done [#allocation6], 16
    $region21: #{tpu_custom_call.1} parent=1 // pred_fallthru
      _
    // Predicated region
    $region22: #{tpu_custom_call.1} parent=1 // pred_check
      _
    $region23: #{tpu_custom_call.1} parent=1 // pred_check_branch
      %50 = sbr.rel (0) target = $region25
    $region24: #{tpu_custom_call.1} parent=1 // pred_region
      %51 = dma.done [#allocation6], 16
    $region25: #{tpu_custom_call.1} parent=1 // pred_fallthru
      _
    %v52 = vld [vmem:[#allocation2] sm:$0xff]
    %v53 = vld [vmem:[#allocation2 + $0x8] sm:$0xff]
    %vm54 = vcmask 261120
    %v55 = vsel %vm54, %v52, 0.0
    %56 = vadd.xlane.f32.xlu0 %v55
    %v57 = vpop.xlane.xlu0 %56
    %v58 = vsel %vm54, %v53, 0.0
    %59 = vadd.xlane.f32.xlu0 %v58
    %v60 = vpop.xlane.xlu0 %59
    %v61 = vrcp.pop 32.0
    %v62 = vmul.f32 %v57, %v61
    %v63 = vmul.f32 %v60, %v61
    %v64 = vsub.f32 %v52, %v62
    %v65 = vsub.f32 %v53, %v63
    %v66 = vmul.f32 %v64, %v64
    %v67 = vmul.f32 %v65, %v65
    %v68 = vsel %vm54, %v66, 0.0
    %69 = vadd.xlane.f32.xlu0 %v68
    %v70 = vpop.xlane.xlu0 %69
    %v71 = vsel %vm54, %v67, 0.0
    %72 = vadd.xlane.f32.xlu0 %v71
    %v73 = vpop.xlane.xlu0 %72
    %v74 = vmul.f32 %v70, %v61
    %v75 = vmul.f32 %v73, %v61
    %v76 = vadd.f32 %v74, 1e-12
    %v77 = vadd.f32 %v75, 1e-12
    %v78 = vrsqrt.pop %v76
    %v79 = vrsqrt.pop %v77
    %v80 = vmul.f32 %v64, %v78
    %v81 = vmul.f32 %v65, %v79
    %v82 = vld [vmem:[#allocation5] sm:$0x1]
    %v84 = vlaneseq
    %v85 = vshrl.u32 %v84, 7
    %v86 = vsub.s32 0, %v85
    %v87 = vrot.slane %v82, %v86
    %v89 = vmul.f32 %v80, %v87
    %v90 = vmul.f32 %v81, %v87
    %v91 = vld [vmem:[#allocation7] sm:$0x1]
    %v93 = vlaneseq
    %v94 = vshrl.u32 %v93, 7
    %v95 = vsub.s32 0, %v94
    %v96 = vrot.slane %v91, %v95
    %v98 = vadd.f32 %v89, %v96
    %v99 = vadd.f32 %v90, %v96
    %v100 = vpack.c.bf16 %v99, %v98
    %v102 = vunpack.c.l.b16 %v100
    %v103 = vunpack.c.h.b16 %v100
    %v104 = vpack.c.b16 %v102, %v102
    %v105 = vpack.c.b16 %v103, %v103
    %vm108 = vcmask 257024
    %109 = vst.msk [vmem:[#allocation8] sm:$0xf] %vm108, %v104
    %110 = vst.msk [vmem:[#allocation8 + $0x4] sm:$0xf] %vm108, %v105
    // Predicated region
    $region26: #{tpu_custom_call.1} parent=1 // pred_check
      _
    $region27: #{tpu_custom_call.1} parent=1 // pred_check_branch
      %112 = sbr.rel (0) target = $region29
    $region28: #{tpu_custom_call.1} parent=1 // pred_region
      %s114 = ssub.s32 128, 128
      %115 = vsyncadd [#allocation4], %s114
      %s116 = sshll.u32 [#allocation8], 4
      %s117 = int_to_ptr.vmem [resolvable:$true] %s116
      %122 = dma.vmem_to_hbm [thread:$0]  %s117, 128, %s3, [#allocation4], 64, 64, 4
    $region29: #{tpu_custom_call.1} parent=1 // pred_fallthru
      _
    // Predicated region
    $region30: #{tpu_custom_call.1} parent=1 // pred_check
      _
    $region31: #{tpu_custom_call.1} parent=1 // pred_check_branch
      %124 = sbr.rel (0) target = $region33
    $region32: #{tpu_custom_call.1} parent=1 // pred_region
      %125 = dma.done [#allocation4], 128
    $region33: #{tpu_custom_call.1} parent=1 // pred_fallthru
      _
    %126 = vsyncpa [#allocation3], 1
    %127 = vsyncpa [#allocation6], 1
    %128 = vsyncpa [#allocation4], 1

</llo_original>
